<compile_context>
chip_gen: v5e
topology: v5e:2x2
jax: 0.10.0
libtpu: 0.0.40
codegen_flags: <defaults>
</compile_context>

<pallas_src>
import functools

import jax
import jax.numpy as jnp
from jax.experimental import pallas as pl
from jax.experimental.pallas import tpu as pltpu


# Per-tile VMEM budget. Input + output tiles, double-buffered, plus f32
# temporaries stay well inside the 32 MiB scoped-VMEM limit requested below.
_TILE_BYTES = 2 * 1024 * 1024
_VMEM_LIMIT = 32 * 1024 * 1024


# ----------------------------------------------------------------------------
# Kernels
# ----------------------------------------------------------------------------

def _ln_channels_last_kernel(x_ref, w_ref, b_ref, o_ref, *, eps):
    # x_ref: (TM, C)   w_ref / b_ref: (1, C)   o_ref: (TM, C)
    x = x_ref[...].astype(jnp.float32)
    mean = jnp.mean(x, axis=-1, keepdims=True)
    xc = x - mean
    var = jnp.mean(xc * xc, axis=-1, keepdims=True)     # biased, matches F.layer_norm
    inv = jax.lax.rsqrt(var + eps)                       # EUP slot
    y = xc * inv
    o_ref[...] = (y * w_ref[...] + b_ref[...]).astype(o_ref.dtype)


def _ln_channels_first_kernel(x_ref, w_ref, b_ref, o_ref, *, eps):
    # x_ref: (1, C, TL) -- spatial positions on lanes (dense), channels on
    # sublanes; the C-reduction is a sublane reduction (XLU slot).
    # w_ref / b_ref: (1, C, 1)
    x = x_ref[...].astype(jnp.float32)
    mean = jnp.mean(x, axis=1, keepdims=True)            # (1, 1, TL)
    xc = x - mean
    var = jnp.mean(xc * xc, axis=1, keepdims=True)       # biased, matches .pow(2).mean(1)
    inv = jax.lax.rsqrt(var + eps)                       # EUP slot
    y = xc * inv
    o_ref[...] = (y * w_ref[...] + b_ref[...]).astype(o_ref.dtype)


# ----------------------------------------------------------------------------
# Wrappers
# ----------------------------------------------------------------------------

def _layer_norm_channels_last(x, weight, bias, eps):
    orig_shape = x.shape
    C = int(orig_shape[-1])
    M = 1
    for d in orig_shape[:-1]:
        M *= int(d)
    x2 = x.reshape(M, C)

    itemsize = jnp.dtype(x.dtype).itemsize
    row_bytes = max(1, C * itemsize)
    max_rows = max(8, (_TILE_BYTES // row_bytes) // 8 * 8)

    if M <= max_rows:
        tm, m_pad = M, M                      # single full-extent tile
    else:
        tm = max_rows
        m_pad = pl.cdiv(M, tm) * tm
        if m_pad != M:                        # ragged remainder only
            x2 = jnp.pad(x2, ((0, m_pad - M), (0, 0)))

    w2 = weight.reshape(1, C).astype(jnp.float32)
    b2 = bias.reshape(1, C).astype(jnp.float32)

    out = pl.pallas_call(
        functools.partial(_ln_channels_last_kernel, eps=eps),
        out_shape=jax.ShapeDtypeStruct((m_pad, C), x.dtype),
        grid_spec=pltpu.PrefetchScalarGridSpec(
            num_scalar_prefetch=0,
            grid=(m_pad // tm,),
            in_specs=[
                pl.BlockSpec((tm, C), lambda i: (i, 0)),
                pl.BlockSpec((1, C), lambda i: (0, 0)),
                pl.BlockSpec((1, C), lambda i: (0, 0)),
            ],
            out_specs=pl.BlockSpec((tm, C), lambda i: (i, 0)),
        ),
        compiler_params=pltpu.CompilerParams(
            dimension_semantics=("parallel",),
            vmem_limit_bytes=_VMEM_LIMIT),
    )(x2, w2, b2)

    if m_pad != M:
        out = out[:M]
    return out.reshape(orig_shape)


def _layer_norm_channels_first(x, weight, bias, eps):
    N, C, H, W = (int(d) for d in x.shape)
    S = H * W
    x3 = x.reshape(N, C, S)                   # contiguous reshape, no transpose

    itemsize = jnp.dtype(x.dtype).itemsize
    col_bytes = max(1, C * itemsize)
    max_cols = max(128, (_TILE_BYTES // col_bytes) // 128 * 128)

    if S <= max_cols:
        tl, s_pad = S, S                      # single full-extent lane tile
    else:
        tl = max_cols
        s_pad = pl.cdiv(S, tl) * tl
        if s_pad != S:                        # ragged remainder only
            x3 = jnp.pad(x3, ((0, 0), (0, 0), (0, s_pad - S)))

    w3 = weight.reshape(1, C, 1).astype(jnp.float32)
    b3 = bias.reshape(1, C, 1).astype(jnp.float32)

    out = pl.pallas_call(
        functools.partial(_ln_channels_first_kernel, eps=eps),
        out_shape=jax.ShapeDtypeStruct((N, C, s_pad), x.dtype),
        grid_spec=pltpu.PrefetchScalarGridSpec(
            num_scalar_prefetch=0,
            grid=(N, s_pad // tl),
            in_specs=[
                pl.BlockSpec((1, C, tl), lambda n, l: (n, 0, l)),
                pl.BlockSpec((1, C, 1), lambda n, l: (0, 0, 0)),
                pl.BlockSpec((1, C, 1), lambda n, l: (0, 0, 0)),
            ],
            out_specs=pl.BlockSpec((1, C, tl), lambda n, l: (n, 0, l)),
        ),
        compiler_params=pltpu.CompilerParams(
            dimension_semantics=("parallel", "parallel"),
            vmem_limit_bytes=_VMEM_LIMIT),
    )(x3, w3, b3)

    if s_pad != S:
        out = out[:, :, :S]
    return out.reshape(N, C, H, W)


@functools.partial(jax.jit, static_argnames=("eps", "data_format"))
def layer_norm_pallas(x, weight, bias, eps=1e-6, data_format="channels_last"):
    """Pallas TPU LayerNorm matching the PyTorch module's forward."""
    if data_format == "channels_last":
        return _layer_norm_channels_last(x, weight, bias, eps)
    elif data_format == "channels_first":
        return _layer_norm_channels_first(x, weight, bias, eps)
    raise NotImplementedError(data_format)


# ----------------------------------------------------------------------------
# Pure-JAX reference (mirrors the PyTorch forward exactly)
# ----------------------------------------------------------------------------

def layer_norm_ref(x, weight, bias, eps=1e-6, data_format="channels_last"):
    if data_format == "channels_last":
        u = jnp.mean(x, axis=-1, keepdims=True)
        s = jnp.mean((x - u) ** 2, axis=-1, keepdims=True)
        y = (x - u) / jnp.sqrt(s + eps)
        return y * weight + bias
    else:
        u = jnp.mean(x, axis=1, keepdims=True)
        s = jnp.mean((x - u) ** 2, axis=1, keepdims=True)
        y = (x - u) / jnp.sqrt(s + eps)
        return (y * weight[None, :, None, None]
                + bias[None, :, None, None])


if __name__ == "__main__":
    key = jax.random.PRNGKey(0)
    ks = jax.random.split(key, 6)

    # --- channels_last: (N, H, W, C), normalize over C (last dim) ---
    N, H, W, C = 2, 8, 8, 32
    x_cl = jax.random.normal(ks[0], (N, H, W, C), dtype=jnp.float32)
    w_cl = 1.0 + 0.1 * jax.random.normal(ks[1], (C,), dtype=jnp.float32)
    b_cl = 0.1 * jax.random.normal(ks[2], (C,), dtype=jnp.float32)

    out_cl = layer_norm_pallas(x_cl, w_cl, b_cl, eps=1e-6,
                               data_format="channels_last")
    out_cl = jax.block_until_ready(out_cl)
    ref_cl = layer_norm_ref(x_cl, w_cl, b_cl, eps=1e-6,
                            data_format="channels_last")
    assert out_cl.shape == x_cl.shape, out_cl.shape
    assert jnp.allclose(out_cl, ref_cl, atol=1e-4, rtol=1e-4), \
        float(jnp.max(jnp.abs(out_cl - ref_cl)))

    # --- channels_first: (N, C, H, W), normalize over C (dim 1) ---
    Nf, Cf, Hf, Wf = 2, 32, 16, 16
    x_cf = jax.random.normal(ks[3], (Nf, Cf, Hf, Wf), dtype=jnp.float32)
    w_cf = 1.0 + 0.1 * jax.random.normal(ks[4], (Cf,), dtype=jnp.float32)
    b_cf = 0.1 * jax.random.normal(ks[5], (Cf,), dtype=jnp.float32)

    out_cf = layer_norm_pallas(x_cf, w_cf, b_cf, eps=1e-6,
                               data_format="channels_first")
    out_cf = jax.block_until_ready(out_cf)
    ref_cf = layer_norm_ref(x_cf, w_cf, b_cf, eps=1e-6,
                            data_format="channels_first")
    assert out_cf.shape == x_cf.shape, out_cf.shape
    assert jnp.allclose(out_cf, ref_cf, atol=1e-4, rtol=1e-4), \
        float(jnp.max(jnp.abs(out_cf - ref_cf)))

    print("KERNEL_OK")
</pallas_src>

<mosaic_0001>
module attributes {stable_mosaic.version = 11 : i64} {
  func.func @_ln_channels_last_kernel(%arg0: i32, %arg1: memref<128x32xf32, #tpu.memory_space<vmem>>, %arg2: memref<1x32xf32, #tpu.memory_space<vmem>>, %arg3: memref<1x32xf32, #tpu.memory_space<vmem>>, %arg4: memref<128x32xf32, #tpu.memory_space<vmem>>) attributes {dimension_semantics = [#tpu.dimension_semantics<parallel>], iteration_bounds = array<i64: 1>, scalar_prefetch = 0 : i64, scratch_operands = 0 : i64, tpu.core_type = #tpu.core_type<tc>, window_params = [{transform_indices = @transform_0, window_bounds = array<i64: 128, 32>}, {pipeline_mode = #tpu.pipeline_mode<synchronous>, transform_indices = @transform_1, window_bounds = array<i64: 1, 32>}, {pipeline_mode = #tpu.pipeline_mode<synchronous>, transform_indices = @transform_2, window_bounds = array<i64: 1, 32>}, {transform_indices = @transform_3, window_bounds = array<i64: 128, 32>}]} {
    %c0 = arith.constant 0 : index
    %c0_0 = arith.constant 0 : index
    %0 = vector.load %arg1[%c0, %c0_0] : memref<128x32xf32, #tpu.memory_space<vmem>>, vector<128x32xf32>
    %cst = arith.constant dense<0.000000e+00> : vector<128xf32>
    %1 = vector.multi_reduction <add>, %0, %cst [1] : vector<128x32xf32> to vector<128xf32>
    %2 = vector.shape_cast %1 : vector<128xf32> to vector<128x1xf32>
    %cst_1 = arith.constant 3.200000e+01 : f32
    %3 = vector.broadcast %cst_1 : f32 to vector<128x1xf32>
    %4 = arith.divf %2, %3 : vector<128x1xf32>
    %5 = vector.broadcast %4 : vector<128x1xf32> to vector<128x32xf32>
    %6 = arith.subf %0, %5 : vector<128x32xf32>
    %7 = arith.mulf %6, %6 : vector<128x32xf32>
    %cst_2 = arith.constant dense<0.000000e+00> : vector<128xf32>
    %8 = vector.multi_reduction <add>, %7, %cst_2 [1] : vector<128x32xf32> to vector<128xf32>
    %9 = vector.shape_cast %8 : vector<128xf32> to vector<128x1xf32>
    %cst_3 = arith.constant 3.200000e+01 : f32
    %10 = vector.broadcast %cst_3 : f32 to vector<128x1xf32>
    %11 = arith.divf %9, %10 : vector<128x1xf32>
    %cst_4 = arith.constant 9.99999997E-7 : f32
    %12 = vector.broadcast %cst_4 : f32 to vector<128x1xf32>
    %13 = arith.addf %11, %12 : vector<128x1xf32>
    %14 = math.rsqrt %13 : vector<128x1xf32>
    %15 = vector.broadcast %14 : vector<128x1xf32> to vector<128x32xf32>
    %16 = arith.mulf %6, %15 : vector<128x32xf32>
    %c0_5 = arith.constant 0 : index
    %c0_6 = arith.constant 0 : index
    %17 = vector.load %arg2[%c0_5, %c0_6] : memref<1x32xf32, #tpu.memory_space<vmem>>, vector<1x32xf32>
    %18 = vector.broadcast %17 : vector<1x32xf32> to vector<128x32xf32>
    %19 = arith.mulf %16, %18 : vector<128x32xf32>
    %c0_7 = arith.constant 0 : index
    %c0_8 = arith.constant 0 : index
    %20 = vector.load %arg3[%c0_7, %c0_8] : memref<1x32xf32, #tpu.memory_space<vmem>>, vector<1x32xf32>
    %21 = vector.broadcast %20 : vector<1x32xf32> to vector<128x32xf32>
    %22 = arith.addf %19, %21 : vector<128x32xf32>
    %c0_9 = arith.constant 0 : index
    %c0_10 = arith.constant 0 : index
    %23 = vector.load %arg4[%c0_9, %c0_10] : memref<128x32xf32, #tpu.memory_space<vmem>>, vector<128x32xf32>
    tpu.vector_store %arg4[%c0_9, %c0_10], %22 {strides = array<i32>} : memref<128x32xf32, #tpu.memory_space<vmem>>, vector<128x32xf32>,
    return
  }
  func.func @transform_0(%arg0: i32) -> (i32, i32) {
    %c0_i32 = arith.constant 0 : i32
    %c0_i32_0 = arith.constant 0 : i32
    return %arg0, %c0_i32 : i32, i32
  }
  func.func @transform_1(%arg0: i32) -> (i32, i32) {
    %c0_i32 = arith.constant 0 : i32
    %c0_i32_0 = arith.constant 0 : i32
    %c0_i32_1 = arith.constant 0 : i32
    return %c0_i32, %c0_i32_0 : i32, i32
  }
  func.func @transform_2(%arg0: i32) -> (i32, i32) {
    %c0_i32 = arith.constant 0 : i32
    %c0_i32_0 = arith.constant 0 : i32
    %c0_i32_1 = arith.constant 0 : i32
    return %c0_i32, %c0_i32_0 : i32, i32
  }
  func.func @transform_3(%arg0: i32) -> (i32, i32) {
    %c0_i32 = arith.constant 0 : i32
    %c0_i32_0 = arith.constant 0 : i32
    return %arg0, %c0_i32 : i32, i32
  }
}

</mosaic_0001>

<llo_original>
// kernel: layer_norm_pallas.1
$region0: #{layer_norm_pallas.1}
  #allocation0 [shape = 'u32[]', space=smem, size = 0x4, offset = 0x4, fixed_abs, tag = 'smem constant byte address 0x4 - core index']
  #allocation1 [shape = 'u32[72,128]{1,0:T(1,128)}', space=vmem, size = 0x9000, scoped, tag = 'internal scratch']
  %s0 = inlined_call_operand.hbm [shape: f32[128,32], index: 0, kind: input, shape index: {}]
  %s1 = inlined_call_operand.vmem [shape: f32[1,32], index: 1, kind: input, shape index: {}]
  %s2 = inlined_call_operand.vmem [shape: f32[1,32], index: 2, kind: input, shape index: {}]
  %s3 = inlined_call_operand.hbm [shape: f32[128,32], index: 3, kind: output, shape index: {}]
  %s4 = sld [smem:[#allocation0]]
  $region26: #{layer_norm_pallas.1} parent=0
    _
  %s6 = ssub.s32 1, %s4
  %s7 = scalar_select 0, %s6, %s4
  $region1: #{layer_norm_pallas.1} parent=0
    #allocation2 [shape = 'u8[65536]{0}', space=vmem, size = 0x10000, scoped, tag = 'input window, operand 0, single buffered']
    #allocation3 [shape = 's32[1]{0}', space=sflag, size = 0x4, scoped, tag = 'scoped memory for layer_norm_pallas.1']
    #allocation4 [shape = 's32[1]{0}', space=sflag, size = 0x4, scoped, tag = 'scoped memory for layer_norm_pallas.1']
    #allocation5 [shape = 'u8[65536]{0}', space=vmem, size = 0x10000, scoped, tag = 'output window, operand 0, single buffered']
    %8 = vsyncpa [#allocation3], 0
    %9 = vsyncpa [#allocation4], 0
    // Predicated region
    $region2: #{layer_norm_pallas.1} parent=1 // pred_check
      _
    $region3: #{layer_norm_pallas.1} parent=1 // pred_check_branch
      %11 = sbr.rel (0) target = $region5
    $region4: #{layer_norm_pallas.1} parent=1 // pred_region
      %13 = vsyncadd [#allocation3], 0
      %s14 = sshll.u32 %s0, 4
      %s15 = int_to_ptr.hbm [resolvable:$true] %s14
      %s16 = sshll.u32 [#allocation2], 4
      %s17 = int_to_ptr.vmem [resolvable:$true] %s16
      %22 = dma.hbm_to_vmem [thread:$0]  %s15, 2048, %s17, [#allocation3], 128, 128, 8
    $region5: #{layer_norm_pallas.1} parent=1 // pred_fallthru
      _
    // Predicated region
    $region6: #{layer_norm_pallas.1} parent=1 // pred_check
      _
    $region7: #{layer_norm_pallas.1} parent=1 // pred_check_branch
      %24 = sbr.rel (0) target = $region9
    $region8: #{layer_norm_pallas.1} parent=1 // pred_region
      _
    $region9: #{layer_norm_pallas.1} parent=1 // pred_fallthru
      _
    // Predicated region
    $region10: #{layer_norm_pallas.1} parent=1 // pred_check
      _
    $region11: #{layer_norm_pallas.1} parent=1 // pred_check_branch
      %26 = sbr.rel (0) target = $region13
    $region12: #{layer_norm_pallas.1} parent=1 // pred_region
      _
    $region13: #{layer_norm_pallas.1} parent=1 // pred_fallthru
      _
    // Predicated region
    $region14: #{layer_norm_pallas.1} parent=1 // pred_check
      _
    $region15: #{layer_norm_pallas.1} parent=1 // pred_check_branch
      %28 = sbr.rel (0) target = $region17
    $region16: #{layer_norm_pallas.1} parent=1 // pred_region
      %30 = dma.done [#allocation3], 2048
    $region17: #{layer_norm_pallas.1} parent=1 // pred_fallthru
      _
    %v31 = vld [vmem:[#allocation2] sm:$0xff]
    %v32 = vld [vmem:[#allocation2 + $0x8] sm:$0xff]
    %v33 = vld [vmem:[#allocation2 + $0x10] sm:$0xff]
    %v34 = vld [vmem:[#allocation2 + $0x18] sm:$0xff]
    %v35 = vld [vmem:[#allocation2 + $0x20] sm:$0xff]
    %v36 = vld [vmem:[#allocation2 + $0x28] sm:$0xff]
    %v37 = vld [vmem:[#allocation2 + $0x30] sm:$0xff]
    %v38 = vld [vmem:[#allocation2 + $0x38] sm:$0xff]
    %v39 = vld [vmem:[#allocation2 + $0x40] sm:$0xff]
    %v40 = vld [vmem:[#allocation2 + $0x48] sm:$0xff]
    %v41 = vld [vmem:[#allocation2 + $0x50] sm:$0xff]
    %v42 = vld [vmem:[#allocation2 + $0x58] sm:$0xff]
    %v43 = vld [vmem:[#allocation2 + $0x60] sm:$0xff]
    %v44 = vld [vmem:[#allocation2 + $0x68] sm:$0xff]
    %v45 = vld [vmem:[#allocation2 + $0x70] sm:$0xff]
    %v46 = vld [vmem:[#allocation2 + $0x78] sm:$0xff]
    %vm47 = vcmask 261120
    %v48 = vsel %vm47, %v31, 0.0
    %49 = vadd.xlane.f32.xlu0 %v48
    %v50 = vpop.xlane.xlu0 %49
    %v51 = vsel %vm47, %v32, 0.0
    %52 = vadd.xlane.f32.xlu0 %v51
    %v53 = vpop.xlane.xlu0 %52
    %v54 = vsel %vm47, %v33, 0.0
    %55 = vadd.xlane.f32.xlu0 %v54
    %v56 = vpop.xlane.xlu0 %55
    %v57 = vsel %vm47, %v34, 0.0
    %58 = vadd.xlane.f32.xlu0 %v57
    %v59 = vpop.xlane.xlu0 %58
    %v60 = vsel %vm47, %v35, 0.0
    %61 = vadd.xlane.f32.xlu0 %v60
    %v62 = vpop.xlane.xlu0 %61
    %v63 = vsel %vm47, %v36, 0.0
    %64 = vadd.xlane.f32.xlu0 %v63
    %v65 = vpop.xlane.xlu0 %64
    %v66 = vsel %vm47, %v37, 0.0
    %67 = vadd.xlane.f32.xlu0 %v66
    %v68 = vpop.xlane.xlu0 %67
    %v69 = vsel %vm47, %v38, 0.0
    %70 = vadd.xlane.f32.xlu0 %v69
    %v71 = vpop.xlane.xlu0 %70
    %v72 = vsel %vm47, %v39, 0.0
    %73 = vadd.xlane.f32.xlu0 %v72
    %v74 = vpop.xlane.xlu0 %73
    %v75 = vsel %vm47, %v40, 0.0
    %76 = vadd.xlane.f32.xlu0 %v75
    %v77 = vpop.xlane.xlu0 %76
    %v78 = vsel %vm47, %v41, 0.0
    %79 = vadd.xlane.f32.xlu0 %v78
    %v80 = vpop.xlane.xlu0 %79
    %v81 = vsel %vm47, %v42, 0.0
    %82 = vadd.xlane.f32.xlu0 %v81
    %v83 = vpop.xlane.xlu0 %82
    %v84 = vsel %vm47, %v43, 0.0
    %85 = vadd.xlane.f32.xlu0 %v84
    %v86 = vpop.xlane.xlu0 %85
    %v87 = vsel %vm47, %v44, 0.0
    %88 = vadd.xlane.f32.xlu0 %v87
    %v89 = vpop.xlane.xlu0 %88
    %v90 = vsel %vm47, %v45, 0.0
    %91 = vadd.xlane.f32.xlu0 %v90
    %v92 = vpop.xlane.xlu0 %91
    %v93 = vsel %vm47, %v46, 0.0
    %94 = vadd.xlane.f32.xlu0 %v93
    %v95 = vpop.xlane.xlu0 %94
    %v96 = vrcp.pop 32.0
    %v97 = vmul.f32 32.0, %v96
    %v98 = vsub.f32 1.0, %v97
    %v99 = vmul.f32 %v96, %v98
    %v100 = vadd.f32 %v96, %v99
    %vm101 = vweird.f32 %v96
    %v102 = vsel %vm101, %v96, %v100
    %v103 = vmul.f32 %v50, %v102
    %v104 = vmul.f32 %v53, %v102
    %v105 = vmul.f32 %v56, %v102
    %v106 = vmul.f32 %v59, %v102
    %v107 = vmul.f32 %v62, %v102
    %v108 = vmul.f32 %v65, %v102
    %v109 = vmul.f32 %v68, %v102
    %v110 = vmul.f32 %v71, %v102
    %v111 = vmul.f32 %v74, %v102
    %v112 = vmul.f32 %v77, %v102
    %v113 = vmul.f32 %v80, %v102
    %v114 = vmul.f32 %v83, %v102
    %v115 = vmul.f32 %v86, %v102
    %v116 = vmul.f32 %v89, %v102
    %v117 = vmul.f32 %v92, %v102
    %v118 = vmul.f32 %v95, %v102
    %v119 = vsub.f32 %v31, %v103
    %v120 = vsub.f32 %v32, %v104
    %v121 = vsub.f32 %v33, %v105
    %v122 = vsub.f32 %v34, %v106
    %v123 = vsub.f32 %v35, %v107
    %v124 = vsub.f32 %v36, %v108
    %v125 = vsub.f32 %v37, %v109
    %v126 = vsub.f32 %v38, %v110
    %v127 = vsub.f32 %v39, %v111
    %v128 = vsub.f32 %v40, %v112
    %v129 = vsub.f32 %v41, %v113
    %v130 = vsub.f32 %v42, %v114
    %v131 = vsub.f32 %v43, %v115
    %v132 = vsub.f32 %v44, %v116
    %v133 = vsub.f32 %v45, %v117
    %v134 = vsub.f32 %v46, %v118
    %v135 = vmul.f32 %v119, %v119
    %v136 = vmul.f32 %v120, %v120
    %v137 = vmul.f32 %v121, %v121
    %v138 = vmul.f32 %v122, %v122
    %v139 = vmul.f32 %v123, %v123
    %v140 = vmul.f32 %v124, %v124
    %v141 = vmul.f32 %v125, %v125
    %v142 = vmul.f32 %v126, %v126
    %v143 = vmul.f32 %v127, %v127
    %v144 = vmul.f32 %v128, %v128
    %v145 = vmul.f32 %v129, %v129
    %v146 = vmul.f32 %v130, %v130
    %v147 = vmul.f32 %v131, %v131
    %v148 = vmul.f32 %v132, %v132
    %v149 = vmul.f32 %v133, %v133
    %v150 = vmul.f32 %v134, %v134
    %v151 = vsel %vm47, %v135, 0.0
    %152 = vadd.xlane.f32.xlu0 %v151
    %v153 = vpop.xlane.xlu0 %152
    %v154 = vsel %vm47, %v136, 0.0
    %155 = vadd.xlane.f32.xlu0 %v154
    %v156 = vpop.xlane.xlu0 %155
    %v157 = vsel %vm47, %v137, 0.0
    %158 = vadd.xlane.f32.xlu0 %v157
    %v159 = vpop.xlane.xlu0 %158
    %v160 = vsel %vm47, %v138, 0.0
    %161 = vadd.xlane.f32.xlu0 %v160
    %v162 = vpop.xlane.xlu0 %161
    %v163 = vsel %vm47, %v139, 0.0
    %164 = vadd.xlane.f32.xlu0 %v163
    %v165 = vpop.xlane.xlu0 %164
    %v166 = vsel %vm47, %v140, 0.0
    %167 = vadd.xlane.f32.xlu0 %v166
    %v168 = vpop.xlane.xlu0 %167
    %v169 = vsel %vm47, %v141, 0.0
    %170 = vadd.xlane.f32.xlu0 %v169
    %v171 = vpop.xlane.xlu0 %170
    %v172 = vsel %vm47, %v142, 0.0
    %173 = vadd.xlane.f32.xlu0 %v172
    %v174 = vpop.xlane.xlu0 %173
    %v175 = vsel %vm47, %v143, 0.0
    %176 = vadd.xlane.f32.xlu0 %v175
    %v177 = vpop.xlane.xlu0 %176
    %v178 = vsel %vm47, %v144, 0.0
    %179 = vadd.xlane.f32.xlu0 %v178
    %v180 = vpop.xlane.xlu0 %179
    %v181 = vsel %vm47, %v145, 0.0
    %182 = vadd.xlane.f32.xlu0 %v181
    %v183 = vpop.xlane.xlu0 %182
    %v184 = vsel %vm47, %v146, 0.0
    %185 = vadd.xlane.f32.xlu0 %v184
    %v186 = vpop.xlane.xlu0 %185
    %v187 = vsel %vm47, %v147, 0.0
    %188 = vadd.xlane.f32.xlu0 %v187
    %v189 = vpop.xlane.xlu0 %188
    %v190 = vsel %vm47, %v148, 0.0
    %191 = vadd.xlane.f32.xlu0 %v190
    %v192 = vpop.xlane.xlu0 %191
    %v193 = vsel %vm47, %v149, 0.0
    %194 = vadd.xlane.f32.xlu0 %v193
    %v195 = vpop.xlane.xlu0 %194
    %v196 = vsel %vm47, %v150, 0.0
    %197 = vadd.xlane.f32.xlu0 %v196
    %v198 = vpop.xlane.xlu0 %197
    %v199 = vmul.f32 %v153, %v102
    %v200 = vmul.f32 %v156, %v102
    %v201 = vmul.f32 %v159, %v102
    %v202 = vmul.f32 %v162, %v102
    %v203 = vmul.f32 %v165, %v102
    %v204 = vmul.f32 %v168, %v102
    %v205 = vmul.f32 %v171, %v102
    %v206 = vmul.f32 %v174, %v102
    %v207 = vmul.f32 %v177, %v102
    %v208 = vmul.f32 %v180, %v102
    %v209 = vmul.f32 %v183, %v102
    %v210 = vmul.f32 %v186, %v102
    %v211 = vmul.f32 %v189, %v102
    %v212 = vmul.f32 %v192, %v102
    %v213 = vmul.f32 %v195, %v102
    %v214 = vmul.f32 %v198, %v102
    %v215 = vadd.f32 %v199, 1e-06
    %v216 = vadd.f32 %v200, 1e-06
    %v217 = vadd.f32 %v201, 1e-06
    %v218 = vadd.f32 %v202, 1e-06
    %v219 = vadd.f32 %v203, 1e-06
    %v220 = vadd.f32 %v204, 1e-06
    %v221 = vadd.f32 %v205, 1e-06
    %v222 = vadd.f32 %v206, 1e-06
    %v223 = vadd.f32 %v207, 1e-06
    %v224 = vadd.f32 %v208, 1e-06
    %v225 = vadd.f32 %v209, 1e-06
    %v226 = vadd.f32 %v210, 1e-06
    %v227 = vadd.f32 %v211, 1e-06
    %v228 = vadd.f32 %v212, 1e-06
    %v229 = vadd.f32 %v213, 1e-06
    %v230 = vadd.f32 %v214, 1e-06
    %v231 = vrsqrt.pop %v215
    %v232 = vmul.f32 %v231, %v215
    %v233 = vmul.f32 %v232, %v231
    %v234 = vmul.f32 0.5, %v233
    %v235 = vsub.f32 1.5, %v234
    %v236 = vmul.f32 %v231, %v235
    %vm237 = vweird.f32 %v215
    %vm238 = vweird.f32 %v231
    %vm239 = vmor %vm237, %vm238
    %v240 = vsel %vm239, %v231, %v236
    %v241 = vrsqrt.pop %v216
    %v242 = vmul.f32 %v241, %v216
    %v243 = vmul.f32 %v242, %v241
    %v244 = vmul.f32 0.5, %v243
    %v245 = vsub.f32 1.5, %v244
    %v246 = vmul.f32 %v241, %v245
    %vm247 = vweird.f32 %v216
    %vm248 = vweird.f32 %v241
    %vm249 = vmor %vm247, %vm248
    %v250 = vsel %vm249, %v241, %v246
    %v251 = vrsqrt.pop %v217
    %v252 = vmul.f32 %v251, %v217
    %v253 = vmul.f32 %v252, %v251
    %v254 = vmul.f32 0.5, %v253
    %v255 = vsub.f32 1.5, %v254
    %v256 = vmul.f32 %v251, %v255
    %vm257 = vweird.f32 %v217
    %vm258 = vweird.f32 %v251
    %vm259 = vmor %vm257, %vm258
    %v260 = vsel %vm259, %v251, %v256
    %v261 = vrsqrt.pop %v218
    %v262 = vmul.f32 %v261, %v218
    %v263 = vmul.f32 %v262, %v261
    %v264 = vmul.f32 0.5, %v263
    %v265 = vsub.f32 1.5, %v264
    %v266 = vmul.f32 %v261, %v265
    %vm267 = vweird.f32 %v218
    %vm268 = vweird.f32 %v261
    %vm269 = vmor %vm267, %vm268
    %v270 = vsel %vm269, %v261, %v266
    %v271 = vrsqrt.pop %v219
    %v272 = vmul.f32 %v271, %v219
    %v273 = vmul.f32 %v272, %v271
    %v274 = vmul.f32 0.5, %v273
    %v275 = vsub.f32 1.5, %v274
    %v276 = vmul.f32 %v271, %v275
    %vm277 = vweird.f32 %v219
    %vm278 = vweird.f32 %v271
    %vm279 = vmor %vm277, %vm278
    %v280 = vsel %vm279, %v271, %v276
    %v281 = vrsqrt.pop %v220
    %v282 = vmul.f32 %v281, %v220
    %v283 = vmul.f32 %v282, %v281
    %v284 = vmul.f32 0.5, %v283
    %v285 = vsub.f32 1.5, %v284
    %v286 = vmul.f32 %v281, %v285
    %vm287 = vweird.f32 %v220
    %vm288 = vweird.f32 %v281
    %vm289 = vmor %vm287, %vm288
    %v290 = vsel %vm289, %v281, %v286
    %v291 = vrsqrt.pop %v221
    %v292 = vmul.f32 %v291, %v221
    %v293 = vmul.f32 %v292, %v291
    %v294 = vmul.f32 0.5, %v293
    %v295 = vsub.f32 1.5, %v294
    %v296 = vmul.f32 %v291, %v295
    %vm297 = vweird.f32 %v221
    %vm298 = vweird.f32 %v291
    %vm299 = vmor %vm297, %vm298
    %v300 = vsel %vm299, %v291, %v296
    %v301 = vrsqrt.pop %v222
    %v302 = vmul.f32 %v301, %v222
    %v303 = vmul.f32 %v302, %v301
    %v304 = vmul.f32 0.5, %v303
    %v305 = vsub.f32 1.5, %v304
    %v306 = vmul.f32 %v301, %v305
    %vm307 = vweird.f32 %v222
    %vm308 = vweird.f32 %v301
    %vm309 = vmor %vm307, %vm308
    %v310 = vsel %vm309, %v301, %v306
    %v311 = vrsqrt.pop %v223
    %v312 = vmul.f32 %v311, %v223
    %v313 = vmul.f32 %v312, %v311
    %v314 = vmul.f32 0.5, %v313
    %v315 = vsub.f32 1.5, %v314
    %v316 = vmul.f32 %v311, %v315
    %vm317 = vweird.f32 %v223
    %vm318 = vweird.f32 %v311
    %vm319 = vmor %vm317, %vm318
    %v320 = vsel %vm319, %v311, %v316
    %v321 = vrsqrt.pop %v224
    %v322 = vmul.f32 %v321, %v224
    %v323 = vmul.f32 %v322, %v321
    %v324 = vmul.f32 0.5, %v323
    %v325 = vsub.f32 1.5, %v324
    %v326 = vmul.f32 %v321, %v325
    %vm327 = vweird.f32 %v224
    %vm328 = vweird.f32 %v321
    %vm329 = vmor %vm327, %vm328
    %v330 = vsel %vm329, %v321, %v326
    %v331 = vrsqrt.pop %v225
    %v332 = vmul.f32 %v331, %v225
    %v333 = vmul.f32 %v332, %v331
    %v334 = vmul.f32 0.5, %v333
    %v335 = vsub.f32 1.5, %v334
    %v336 = vmul.f32 %v331, %v335
    %vm337 = vweird.f32 %v225
    %vm338 = vweird.f32 %v331
    %vm339 = vmor %vm337, %vm338
    %v340 = vsel %vm339, %v331, %v336
    %v341 = vrsqrt.pop %v226
    %v342 = vmul.f32 %v341, %v226
    %v343 = vmul.f32 %v342, %v341
    %v344 = vmul.f32 0.5, %v343
    %v345 = vsub.f32 1.5, %v344
    %v346 = vmul.f32 %v341, %v345
    %vm347 = vweird.f32 %v226
    %vm348 = vweird.f32 %v341
    %vm349 = vmor %vm347, %vm348
    %v350 = vsel %vm349, %v341, %v346
    %v351 = vrsqrt.pop %v227
    %v352 = vmul.f32 %v351, %v227
    %v353 = vmul.f32 %v352, %v351
    %v354 = vmul.f32 0.5, %v353
    %v355 = vsub.f32 1.5, %v354
    %v356 = vmul.f32 %v351, %v355
    %vm357 = vweird.f32 %v227
    %vm358 = vweird.f32 %v351
    %vm359 = vmor %vm357, %vm358
    %v360 = vsel %vm359, %v351, %v356
    %v361 = vrsqrt.pop %v228
    %v362 = vmul.f32 %v361, %v228
    %v363 = vmul.f32 %v362, %v361
    %v364 = vmul.f32 0.5, %v363
    %v365 = vsub.f32 1.5, %v364
    %v366 = vmul.f32 %v361, %v365
    %vm367 = vweird.f32 %v228
    %vm368 = vweird.f32 %v361
    %vm369 = vmor %vm367, %vm368
    %v370 = vsel %vm369, %v361, %v366
    %v371 = vrsqrt.pop %v229
    %v372 = vmul.f32 %v371, %v229
    %v373 = vmul.f32 %v372, %v371
    %v374 = vmul.f32 0.5, %v373
    %v375 = vsub.f32 1.5, %v374
    %v376 = vmul.f32 %v371, %v375
    %vm377 = vweird.f32 %v229
    %vm378 = vweird.f32 %v371
    %vm379 = vmor %vm377, %vm378
    %v380 = vsel %vm379, %v371, %v376
    %v381 = vrsqrt.pop %v230
    %v382 = vmul.f32 %v381, %v230
    %v383 = vmul.f32 %v382, %v381
    %v384 = vmul.f32 0.5, %v383
    %v385 = vsub.f32 1.5, %v384
    %v386 = vmul.f32 %v381, %v385
    %vm387 = vweird.f32 %v230
    %vm388 = vweird.f32 %v381
    %vm389 = vmor %vm387, %vm388
    %v390 = vsel %vm389, %v381, %v386
    %v391 = vmul.f32 %v119, %v240
    %v392 = vmul.f32 %v120, %v250
    %v393 = vmul.f32 %v121, %v260
    %v394 = vmul.f32 %v122, %v270
    %v395 = vmul.f32 %v123, %v280
    %v396 = vmul.f32 %v124, %v290
    %v397 = vmul.f32 %v125, %v300
    %v398 = vmul.f32 %v126, %v310
    %v399 = vmul.f32 %v127, %v320
    %v400 = vmul.f32 %v128, %v330
    %v401 = vmul.f32 %v129, %v340
    %v402 = vmul.f32 %v130, %v350
    %v403 = vmul.f32 %v131, %v360
    %v404 = vmul.f32 %v132, %v370
    %v405 = vmul.f32 %v133, %v380
    %v406 = vmul.f32 %v134, %v390
    %v407 = vld [vmem:[%s1] sm:$0x1]
    %v409 = vperm.slane %v407, 0
    %v411 = vmul.f32 %v391, %v409
    %v412 = vmul.f32 %v392, %v409
    %v413 = vmul.f32 %v393, %v409
    %v414 = vmul.f32 %v394, %v409
    %v415 = vmul.f32 %v395, %v409
    %v416 = vmul.f32 %v396, %v409
    %v417 = vmul.f32 %v397, %v409
    %v418 = vmul.f32 %v398, %v409
    %v419 = vmul.f32 %v399, %v409
    %v420 = vmul.f32 %v400, %v409
    %v421 = vmul.f32 %v401, %v409
    %v422 = vmul.f32 %v402, %v409
    %v423 = vmul.f32 %v403, %v409
    %v424 = vmul.f32 %v404, %v409
    %v425 = vmul.f32 %v405, %v409
    %v426 = vmul.f32 %v406, %v409
    %v427 = vld [vmem:[%s2] sm:$0x1]
    %v429 = vperm.slane %v427, 0
    %v431 = vadd.f32 %v411, %v429
    %v432 = vadd.f32 %v412, %v429
    %v433 = vadd.f32 %v413, %v429
    %v434 = vadd.f32 %v414, %v429
    %v435 = vadd.f32 %v415, %v429
    %v436 = vadd.f32 %v416, %v429
    %v437 = vadd.f32 %v417, %v429
    %v438 = vadd.f32 %v418, %v429
    %v439 = vadd.f32 %v419, %v429
    %v440 = vadd.f32 %v420, %v429
    %v441 = vadd.f32 %v421, %v429
    %v442 = vadd.f32 %v422, %v429
    %v443 = vadd.f32 %v423, %v429
    %v444 = vadd.f32 %v424, %v429
    %v445 = vadd.f32 %v425, %v429
    %v446 = vadd.f32 %v426, %v429
    %447 = vst.msk [vmem:[#allocation5] sm:$0xff] %vm47, %v431
    %448 = vst.msk [vmem:[#allocation5 + $0x8] sm:$0xff] %vm47, %v432
    %449 = vst.msk [vmem:[#allocation5 + $0x10] sm:$0xff] %vm47, %v433
    %450 = vst.msk [vmem:[#allocation5 + $0x18] sm:$0xff] %vm47, %v434
    %451 = vst.msk [vmem:[#allocation5 + $0x20] sm:$0xff] %vm47, %v435
    %452 = vst.msk [vmem:[#allocation5 + $0x28] sm:$0xff] %vm47, %v436
    %453 = vst.msk [vmem:[#allocation5 + $0x30] sm:$0xff] %vm47, %v437
    %454 = vst.msk [vmem:[#allocation5 + $0x38] sm:$0xff] %vm47, %v438
    %455 = vst.msk [vmem:[#allocation5 + $0x40] sm:$0xff] %vm47, %v439
    %456 = vst.msk [vmem:[#allocation5 + $0x48] sm:$0xff] %vm47, %v440
    %457 = vst.msk [vmem:[#allocation5 + $0x50] sm:$0xff] %vm47, %v441
    %458 = vst.msk [vmem:[#allocation5 + $0x58] sm:$0xff] %vm47, %v442
    %459 = vst.msk [vmem:[#allocation5 + $0x60] sm:$0xff] %vm47, %v443
    %460 = vst.msk [vmem:[#allocation5 + $0x68] sm:$0xff] %vm47, %v444
    %461 = vst.msk [vmem:[#allocation5 + $0x70] sm:$0xff] %vm47, %v445
    %462 = vst.msk [vmem:[#allocation5 + $0x78] sm:$0xff] %vm47, %v446
    // Predicated region
    $region18: #{layer_norm_pallas.1} parent=1 // pred_check
      _
    $region19: #{layer_norm_pallas.1} parent=1 // pred_check_branch
      %464 = sbr.rel (0) target = $region21
    $region20: #{layer_norm_pallas.1} parent=1 // pred_region
      %466 = vsyncadd [#allocation4], 0
      %s467 = sshll.u32 [#allocation5], 4
      %s468 = int_to_ptr.vmem [resolvable:$true] %s467
      %s469 = sshll.u32 %s3, 4
      %s470 = int_to_ptr.hbm [resolvable:$true] %s469
      %475 = dma.vmem_to_hbm [thread:$0]  %s468, 2048, %s470, [#allocation4], 128, 128, 8
    $region21: #{layer_norm_pallas.1} parent=1 // pred_fallthru
      _
    // Predicated region
    $region22: #{layer_norm_pallas.1} parent=1 // pred_check
      _
    $region23: #{layer_norm_pallas.1} parent=1 // pred_check_branch
      %477 = sbr.rel (0) target = $region25
    $region24: #{layer_norm_pallas.1} parent=1 // pred_region
      %479 = dma.done [#allocation4], 2048
    $region25: #{layer_norm_pallas.1} parent=1 // pred_fallthru
      _
    %480 = vsyncpa [#allocation3], 1
    %481 = vsyncpa [#allocation4], 1

</llo_original>
